<compile_context>
chip_gen: v5e
topology: v5e:2x2
jax: 0.10.0
libtpu: 0.0.40
codegen_flags: <defaults>
</compile_context>

<pallas_src>
import functools
import numpy as np

import jax
import jax.numpy as jnp
from jax import lax
from jax.experimental import pallas as pl
from jax.experimental.pallas import tpu as pltpu


def _round_up(x, m):
    return ((x + m - 1) // m) * m


# ----------------------------------------------------------------------------
# Kernel 1: softmax cross-entropy, lane-dense (C, N) layout, per-image sums.
# ----------------------------------------------------------------------------
def _ce_kernel(logits_ref, labels_ref, out_ref, acc_ref):
    j = pl.program_id(1)

    @pl.when(j == 0)
    def _():
        acc_ref[...] = jnp.zeros_like(acc_ref)

    x = logits_ref[...].astype(jnp.float32)          # (C, TN): classes on sublanes, pixels on lanes
    lbl = labels_ref[...]                            # (1, TN) int32

    m = jnp.max(x, axis=0, keepdims=True)            # (1, TN)
    lse = m + jnp.log(jnp.sum(jnp.exp(x - m), axis=0, keepdims=True))

    row = lax.broadcasted_iota(jnp.int32, x.shape, 0)
    picked = jnp.sum(jnp.where(row == lbl, x, 0.0), axis=0, keepdims=True)

    # Padded / out-of-range (ignore) labels contribute 0; mean divisor handled outside.
    valid = jnp.logical_and(lbl >= 0, lbl < x.shape[0])
    loss = jnp.where(valid, lse - picked, 0.0)       # (1, TN)

    acc_ref[...] = acc_ref[...] + jnp.sum(loss, axis=1, keepdims=True)

    @pl.when(j == pl.num_programs(1) - 1)
    def _():
        out_ref[...] = acc_ref[...]


@functools.lru_cache(maxsize=None)
def _build_ce_fn(b, c, hw, tn):
    hwpad = _round_up(hw, tn)
    nblk = hwpad // tn

    kernel = pl.pallas_call(
        _ce_kernel,
        out_shape=jax.ShapeDtypeStruct((b, 1, 1), jnp.float32),
        grid_spec=pltpu.PrefetchScalarGridSpec(
            num_scalar_prefetch=0,
            grid=(b, nblk),
            in_specs=[
                pl.BlockSpec((None, c, tn), lambda i, j: (i, 0, j)),
                pl.BlockSpec((None, 1, tn), lambda i, j: (i, 0, j)),
            ],
            out_specs=pl.BlockSpec((None, 1, 1), lambda i, j: (i, 0, 0)),
            scratch_shapes=[pltpu.VMEM((1, 1), jnp.float32)],
        ),
        compiler_params=pltpu.CompilerParams(
            dimension_semantics=("parallel", "arbitrary")),
    )

    def fn(cls_score, label):
        # NCHW is already class-major: reshape only, no transpose.
        logits = cls_score.reshape(b, c, hw).astype(jnp.float32)
        labels = label.reshape(b, 1, hw).astype(jnp.int32)
        if hwpad != hw:
            logits = jnp.pad(logits, ((0, 0), (0, 0), (0, hwpad - hw)))
            labels = jnp.pad(labels, ((0, 0), (0, 0), (0, hwpad - hw)),
                             constant_values=-1)
        per_image = kernel(logits, labels)            # (b, 1, 1) per-image sums
        return jnp.sum(per_image) / jnp.float32(b * hw)

    return jax.jit(fn)


def cross_entropy_mean(cls_score, label):
    """F.cross_entropy(pred, label, reduction='mean') for NCHW pred / (B,H,W) label."""
    b, c, h, w = cls_score.shape
    hw = h * w
    tn = 4096 if hw >= 4096 else _round_up(hw, 128)
    return _build_ce_fn(b, c, hw, tn)(cls_score, label)


# ----------------------------------------------------------------------------
# Kernel 2: batched, L-tiled masked column-wise cosine similarity sums.
#   inputs  A, V : (P, C, Lpad)   paired columns (channels on sublanes, cols on lanes)
#           mask : (P, 1, Lpad)
#   output  sums : (P, 1, 1)      sum over masked columns of cos(A[:,t], V[:,t])
# ----------------------------------------------------------------------------
def _cos_kernel(a_ref, v_ref, m_ref, out_ref, acc_ref):
    l = pl.program_id(1)

    @pl.when(l == 0)
    def _():
        acc_ref[...] = jnp.zeros_like(acc_ref)

    a = a_ref[...].astype(jnp.float32)               # (C, TL)
    v = v_ref[...].astype(jnp.float32)
    m = m_ref[...]                                   # (1, TL)

    dot = jnp.sum(a * v, axis=0, keepdims=True)
    na2 = jnp.sum(a * a, axis=0, keepdims=True)
    nv2 = jnp.sum(v * v, axis=0, keepdims=True)
    eps2 = jnp.float32(1e-16)                        # (1e-8)^2: per-norm eps clamp (torch semantics)
    cos = dot * lax.rsqrt(jnp.maximum(na2, eps2)) * lax.rsqrt(jnp.maximum(nv2, eps2))
    acc_ref[...] = acc_ref[...] + jnp.sum(cos * m, axis=1, keepdims=True)

    @pl.when(l == pl.num_programs(1) - 1)
    def _():
        out_ref[...] = acc_ref[...]


@functools.lru_cache(maxsize=None)
def _build_cos_call(p, c, lpad, tl):
    return pl.pallas_call(
        _cos_kernel,
        out_shape=jax.ShapeDtypeStruct((p, 1, 1), jnp.float32),
        grid_spec=pltpu.PrefetchScalarGridSpec(
            num_scalar_prefetch=0,
            grid=(p, lpad // tl),
            in_specs=[
                pl.BlockSpec((None, c, tl), lambda i, l: (i, 0, l)),
                pl.BlockSpec((None, c, tl), lambda i, l: (i, 0, l)),
                pl.BlockSpec((None, 1, tl), lambda i, l: (i, 0, l)),
            ],
            out_specs=pl.BlockSpec((None, 1, 1), lambda i, l: (i, 0, 0)),
            scratch_shapes=[pltpu.VMEM((1, 1), jnp.float32)],
        ),
        compiler_params=pltpu.CompilerParams(
            dimension_semantics=("parallel", "arbitrary")),
    )


@functools.lru_cache(maxsize=None)
def _build_contrastive_fn(b, c, hw, p, lpad, tl):
    cos_call = _build_cos_call(p, c, lpad, tl)

    def fn(cs3, img_idx, a_idx, b_idx, mask, inv_len, neg_ids, pos_ids, pair_scale):
        # On-device column gather of cls_score (pixel-major) into paired (P, C, Lpad) slabs.
        cs_cols = jnp.swapaxes(cs3, 1, 2).reshape(b * hw, c)            # (B*HW, C)
        flat_a = img_idx[:, None] * hw + a_idx                          # (P, Lpad)
        flat_b = img_idx[:, None] * hw + b_idx
        a_cols = jnp.swapaxes(jnp.take(cs_cols, flat_a, axis=0), 1, 2)  # (P, C, Lpad)
        v_cols = jnp.swapaxes(jnp.take(cs_cols, flat_b, axis=0), 1, 2)

        sums = cos_call(a_cols, v_cols, mask)[:, 0, 0]                  # (P,)
        vals = sums * inv_len                                           # mean cosine per work item
        pair = (vals[neg_ids] + 1.0) / (vals[pos_ids] + 1.0)            # (Q,)
        return jnp.sum(pair * pair_scale)

    return jax.jit(fn)


# ----------------------------------------------------------------------------
# PatchwiseContrastiveLoss.forward  (use_sigmoid=False, use_mask=False,
#                                    reduction='mean', class_weight=None)
# ----------------------------------------------------------------------------
def patchwise_contrastive_loss(cls_score, label, loss_weight=0.1):
    b, c, h, w = cls_score.shape
    hw = h * w

    # --- segmentation CE term (Pallas, lane-dense, tiled, image-parallel) ---
    loss_cls = cross_entropy_mean(cls_score, label)

    # --- contrastive term ---
    # Small on-device reductions; only tiny per-pixel int/float maps go to the host for the
    # data-dependent class-set / region bookkeeping (dynamic shapes).
    cls_score = cls_score.astype(jnp.float32)
    cs3 = cls_score.reshape(b, c, hw)
    cls_result_d = jnp.argmax(cs3, axis=1).astype(jnp.int32) + 1        # (B, HW)
    csum_d = jnp.sum(cs3, axis=1)                                       # (B, HW) channel sums
    lb1_d = label.reshape(b, hw).astype(jnp.int32) + 1

    cls_result = np.asarray(cls_result_d)
    csum = np.asarray(csum_d)
    lb1 = np.asarray(lb1_d)
    diff = (cls_result == lb1)
    nonzero_col = (csum != 0.0)          # same compaction test as phi.sum(dim=0) != 0

    # TODO(synk): per-image class-set discovery / nonzero-column compaction produce dynamic
    # shapes and stay as host-side index bookkeeping; the dense math runs in Pallas.
    items_img, items_a, items_b, items_len = [], [], [], []
    pending = []                          # (image, neg_item_id, pos_item_id)
    n_cross_per_img = [0] * b

    for i in range(b):
        classes = sorted(set(lb1[i].tolist()))
        tt_cols = {}
        pairs_i = []
        for j in classes:
            if j == 256:
                continue
            pred_j = (cls_result[i] == j)
            tt_mask = pred_j & diff[i]
            ft_mask = pred_j & (~diff[i])
            tt_cols[j] = np.flatnonzero(tt_mask & nonzero_col[i])
            for k in sorted(set((lb1[i] * ft_mask).tolist())):
                if k == 256 or k == 0:
                    continue
                cross_cols = np.flatnonzero((lb1[i] == k) & ft_mask & nonzero_col[i])
                pairs_i.append((j, k, cross_cols))
        n_cross_per_img[i] = len(pairs_i)

        for (j, k, cross_cols) in pairs_i:
            lc = cross_cols.size
            phi1_cols = tt_cols[j]        # negative ref: correctly-predicted region of class j
            phi2_cols = tt_cols[k]        # positive ref: correctly-predicted region of class k
            l1, l2 = phi1_cols.size, phi2_cols.size
            if lc == 0:
                # TODO(synk): reference would raise ZeroDivisionError here; we skip the pair.
                continue
            if l1 <= lc:
                if l1 == 0:
                    continue
                a_neg, b_neg = cross_cols[:l1], phi1_cols
            else:
                step = l1 // lc
                a_neg, b_neg = np.tile(cross_cols, step), phi1_cols[:step * lc]
            if l2 <= lc:
                if l2 == 0:
                    continue
                a_pos, b_pos = cross_cols[:l2], phi2_cols
            else:
                step = l2 // lc
                a_pos, b_pos = np.tile(cross_cols, step), phi2_cols[:step * lc]

            nq = len(items_len)
            items_img.append(i); items_a.append(a_neg); items_b.append(b_neg); items_len.append(a_neg.size)
            pq = len(items_len)
            items_img.append(i); items_a.append(a_pos); items_b.append(b_pos); items_len.append(a_pos.size)
            pending.append((i, nq, pq))

    contrastive = jnp.float32(0.0)
    P = len(items_len)
    if P > 0:
        lmax = max(items_len)
        tl = 2048 if lmax > 2048 else _round_up(lmax, 128)
        lpad = _round_up(lmax, tl)
        p_pad = max(1, 1 << (P - 1).bit_length())     # pad item count -> fewer recompiles

        img_idx = np.zeros((p_pad,), np.int32)
        a_idx = np.zeros((p_pad, lpad), np.int32)
        b_idx = np.zeros((p_pad, lpad), np.int32)
        msk = np.zeros((p_pad, 1, lpad), np.float32)
        inv_len = np.zeros((p_pad,), np.float32)
        for q in range(P):
            L = items_len[q]
            img_idx[q] = items_img[q]
            a_idx[q, :L] = items_a[q]
            b_idx[q, :L] = items_b[q]
            msk[q, 0, :L] = 1.0
            inv_len[q] = 1.0 / L

        neg_ids = np.asarray([nq for (_, nq, _) in pending], np.int32)
        pos_ids = np.asarray([pq for (_, _, pq) in pending], np.int32)
        pair_scale = np.asarray([1.0 / (b * n_cross_per_img[i]) for (i, _, _) in pending],
                                np.float32)

        fn = _build_contrastive_fn(b, c, hw, p_pad, lpad, tl)
        contrastive = fn(cs3,
                         jnp.asarray(img_idx), jnp.asarray(a_idx), jnp.asarray(b_idx),
                         jnp.asarray(msk), jnp.asarray(inv_len),
                         jnp.asarray(neg_ids), jnp.asarray(pos_ids), jnp.asarray(pair_scale))

    loss2 = loss_weight * contrastive + loss_cls
    return jnp.reshape(loss2, (1,))       # matches the (1,)-shaped PyTorch result


if __name__ == "__main__":
    # C is hard-coded to 21 by the reference (torch.reshape(..., (21, -1))).
    B, C, H, W = 2, 21, 8, 8
    key = jax.random.PRNGKey(0)
    k1, k2 = jax.random.split(key)
    cls_score = jax.random.normal(k1, (B, C, H, W), dtype=jnp.float32)
    label = jax.random.randint(k2, (B, H, W), 0, C, dtype=jnp.int32)

    loss = patchwise_contrastive_loss(cls_score, label, loss_weight=0.1)
    loss = jax.block_until_ready(loss)
    assert loss.shape == (1,) and bool(jnp.isfinite(loss[0]))
    print("KERNEL_OK")
</pallas_src>

<mosaic_0001>
module attributes {stable_mosaic.version = 11 : i64} {
  func.func @_ce_kernel(%arg0: i32, %arg1: i32, %arg2: memref<1x21x128xf32, #tpu.memory_space<vmem>>, %arg3: memref<1x1x128xi32, #tpu.memory_space<vmem>>, %arg4: memref<1x1x1xf32, #tpu.memory_space<vmem>>, %arg5: memref<1x1xf32, #tpu.memory_space<vmem>>) attributes {dimension_semantics = [#tpu.dimension_semantics<parallel>, #tpu.dimension_semantics<arbitrary>], iteration_bounds = array<i64: 2, 1>, scalar_prefetch = 0 : i64, scratch_operands = 1 : i64, tpu.core_type = #tpu.core_type<tc>, window_params = [{transform_indices = @transform_0, window_bounds = array<i64: 1, 21, 128>}, {transform_indices = @transform_1, window_bounds = array<i64: 1, 1, 128>}, {transform_indices = @transform_2, window_bounds = array<i64: 1, 1, 1>}]} {
    %c0_i32 = arith.constant 0 : i32
    %0 = arith.cmpi eq, %arg1, %c0_i32 : i32
    %1 = arith.extui %0 : i1 to i32
    %c0_i32_0 = arith.constant 0 : i32
    %2 = arith.cmpi ne, %1, %c0_i32_0 : i32
    scf.if %2 {
      %cst_18 = arith.constant 0.000000e+00 : f32
      %39 = vector.broadcast %cst_18 : f32 to vector<1x1xf32>
      %c0_19 = arith.constant 0 : index
      %c0_20 = arith.constant 0 : index
      %40 = vector.load %arg5[%c0_19, %c0_20] : memref<1x1xf32, #tpu.memory_space<vmem>>, vector<1x1xf32>
      tpu.vector_store %arg5[%c0_19, %c0_20], %39 {strides = array<i32>} : memref<1x1xf32, #tpu.memory_space<vmem>>, vector<1x1xf32>,
    } else {
    }
    %c0 = arith.constant 0 : index
    %c0_1 = arith.constant 0 : index
    %c0_2 = arith.constant 0 : index
    %3 = vector.load %arg2[%c0, %c0_1, %c0_2] : memref<1x21x128xf32, #tpu.memory_space<vmem>>, vector<1x21x128xf32>
    %4 = vector.shape_cast %3 : vector<1x21x128xf32> to vector<21x128xf32>
    %c0_3 = arith.constant 0 : index
    %c0_4 = arith.constant 0 : index
    %c0_5 = arith.constant 0 : index
    %5 = vector.load %arg3[%c0_3, %c0_4, %c0_5] : memref<1x1x128xi32, #tpu.memory_space<vmem>>, vector<1x1x128xi32>
    %6 = vector.shape_cast %5 : vector<1x1x128xi32> to vector<1x128xi32>
    %cst = arith.constant dense<0xFF800000> : vector<128xf32>
    %7 = vector.multi_reduction <maximumf>, %4, %cst [0] : vector<21x128xf32> to vector<128xf32>
    %8 = vector.shape_cast %7 : vector<128xf32> to vector<1x128xf32>
    %9 = vector.broadcast %8 : vector<1x128xf32> to vector<21x128xf32>
    %10 = arith.subf %4, %9 : vector<21x128xf32>
    %11 = math.exp %10 : vector<21x128xf32>
    %cst_6 = arith.constant dense<0.000000e+00> : vector<128xf32>
    %12 = vector.multi_reduction <add>, %11, %cst_6 [0] : vector<21x128xf32> to vector<128xf32>
    %13 = vector.shape_cast %12 : vector<128xf32> to vector<1x128xf32>
    %14 = math.log %13 : vector<1x128xf32>
    %15 = arith.addf %8, %14 : vector<1x128xf32>
    %16 = tpu.iota {dimensions = array<i32: 0>} : vector<21x128xi32>
    %17 = vector.broadcast %6 : vector<1x128xi32> to vector<21x128xi32>
    %18 = arith.cmpi eq, %16, %17 : vector<21x128xi32>
    %cst_7 = arith.constant 0.000000e+00 : f32
    %19 = vector.broadcast %cst_7 : f32 to vector<21x128xf32>
    %20 = arith.select %18, %4, %19 : vector<21x128xi1>, vector<21x128xf32>
    %cst_8 = arith.constant dense<0.000000e+00> : vector<128xf32>
    %21 = vector.multi_reduction <add>, %20, %cst_8 [0] : vector<21x128xf32> to vector<128xf32>
    %22 = vector.shape_cast %21 : vector<128xf32> to vector<1x128xf32>
    %c0_i32_9 = arith.constant 0 : i32
    %23 = vector.broadcast %c0_i32_9 : i32 to vector<1x128xi32>
    %24 = arith.cmpi sge, %6, %23 : vector<1x128xi32>
    %c21_i32 = arith.constant 21 : i32
    %25 = vector.broadcast %c21_i32 : i32 to vector<1x128xi32>
    %26 = arith.cmpi slt, %6, %25 : vector<1x128xi32>
    %27 = arith.andi %24, %26 : vector<1x128xi1>
    %28 = arith.subf %15, %22 : vector<1x128xf32>
    %cst_10 = arith.constant 0.000000e+00 : f32
    %29 = vector.broadcast %cst_10 : f32 to vector<1x128xf32>
    %30 = arith.select %27, %28, %29 : vector<1x128xi1>, vector<1x128xf32>
    %c0_11 = arith.constant 0 : index
    %c0_12 = arith.constant 0 : index
    %31 = vector.load %arg5[%c0_11, %c0_12] : memref<1x1xf32, #tpu.memory_space<vmem>>, vector<1x1xf32>
    %cst_13 = arith.constant dense<0.000000e+00> : vector<1xf32>
    %32 = vector.multi_reduction <add>, %30, %cst_13 [1] : vector<1x128xf32> to vector<1xf32>
    %33 = vector.shape_cast %32 : vector<1xf32> to vector<1x1xf32>
    %34 = arith.addf %31, %33 : vector<1x1xf32>
    %c0_14 = arith.constant 0 : index
    %c0_15 = arith.constant 0 : index
    %35 = vector.load %arg5[%c0_14, %c0_15] : memref<1x1xf32, #tpu.memory_space<vmem>>, vector<1x1xf32>
    tpu.vector_store %arg5[%c0_14, %c0_15], %34 {strides = array<i32>} : memref<1x1xf32, #tpu.memory_space<vmem>>, vector<1x1xf32>,
    %c0_i32_16 = arith.constant 0 : i32
    %36 = arith.cmpi eq, %arg1, %c0_i32_16 : i32
    %37 = arith.extui %36 : i1 to i32
    %c0_i32_17 = arith.constant 0 : i32
    %38 = arith.cmpi ne, %37, %c0_i32_17 : i32
    scf.if %38 {
      %c0_18 = arith.constant 0 : index
      %c0_19 = arith.constant 0 : index
      %39 = vector.load %arg5[%c0_18, %c0_19] : memref<1x1xf32, #tpu.memory_space<vmem>>, vector<1x1xf32>
      %c0_20 = arith.constant 0 : index
      %c0_21 = arith.constant 0 : index
      %c0_22 = arith.constant 0 : index
      %40 = vector.load %arg4[%c0_20, %c0_21, %c0_22] : memref<1x1x1xf32, #tpu.memory_space<vmem>>, vector<1x1x1xf32>
      %41 = vector.shape_cast %40 : vector<1x1x1xf32> to vector<1x1xf32>
      %42 = vector.shape_cast %39 : vector<1x1xf32> to vector<1x1x1xf32>
      tpu.vector_store %arg4[%c0_20, %c0_21, %c0_22], %42 {strides = array<i32>} : memref<1x1x1xf32, #tpu.memory_space<vmem>>, vector<1x1x1xf32>,
    } else {
    }
    return
  }
  func.func @transform_0(%arg0: i32, %arg1: i32) -> (i32, i32, i32) {
    %c0_i32 = arith.constant 0 : i32
    %c0_i32_0 = arith.constant 0 : i32
    return %arg0, %c0_i32, %arg1 : i32, i32, i32
  }
  func.func @transform_1(%arg0: i32, %arg1: i32) -> (i32, i32, i32) {
    %c0_i32 = arith.constant 0 : i32
    %c0_i32_0 = arith.constant 0 : i32
    return %arg0, %c0_i32, %arg1 : i32, i32, i32
  }
  func.func @transform_2(%arg0: i32, %arg1: i32) -> (i32, i32, i32) {
    %c0_i32 = arith.constant 0 : i32
    %c0_i32_0 = arith.constant 0 : i32
    %c0_i32_1 = arith.constant 0 : i32
    return %arg0, %c0_i32, %c0_i32_0 : i32, i32, i32
  }
}

</mosaic_0001>

<llo_original>
// kernel: fn.1
$region0: #{fn.1}
  #allocation0 [shape = 'u32[]', space=smem, size = 0x4, offset = 0x4, fixed_abs, tag = 'smem constant byte address 0x4 - core index']
  #allocation1 [shape = 'u32[72,128]{1,0:T(1,128)}', space=vmem, size = 0x9000, scoped, tag = 'internal scratch']
  #allocation2 [shape = 'f32[1,1]{1,0:T(1,128)}', space=vmem, size = 0x200, scoped, tag = 'scratch operand']
  %s0 = inlined_call_operand.vmem [shape: f32[2,21,128], index: 0, kind: input, shape index: {}]
  %s1 = inlined_call_operand.vmem [shape: s32[2,1,128], index: 1, kind: input, shape index: {}]
  %s2 = inlined_call_operand.vmem [shape: f32[2,1,1], index: 2, kind: output, shape index: {}]
  %s3 = sld [smem:[#allocation0]]
  $region49: #{fn.1} parent=0
    _
  %s5 = ssub.s32 1, %s3
  %s6 = scalar_select 0, %s5, %s3
  loop: start=0, step=1, limit=4
  $region2: #{fn.1} parent=0 // loop_pre_header
    _
  $region3: #{fn.1} parent=0 // loop_header
    %s8 = sphi 0, %s12
    %p9 = scmp.ge.s32.totalorder %s8, 4
    %s15 = sphi 0, %s27
    %s16 = sphi 0, %s23
    %s17 = sphi 0, %s15
    %s18 = sphi 0, %s16
    %s19 = sphi 0, %s17
    %s20 = sphi 0, %s18
    %s32 = sphi 0, %s34
    %s35 = sphi 0, %s32
    %s36 = sphi 0, %s35
    %s52 = sphi 0, %s36
    %s60 = sphi 0, %s62
    %s63 = sphi 0, %s60
    %s64 = sphi 0, %s63
    %s80 = sphi 0, %s64
    %s86 = sphi 0, %s88
    %s89 = sphi 0, %s86
    %s90 = sphi 0, %s89
    %s106 = sphi 0, %s90
  $region4: #{fn.1} parent=0 // loop_header_branch
    %11 = sbr.rel (%p9) target = $region8
  $region5: #{fn.1} parent=0 // loop_body
    %s13 = ssub.s32 %s8, 1
    %s14 = ssub.s32 %s8, 2
    %s21 = sadd.s32 1, %s16
    %p22 = scmp.ge.s32.totalorder %s21, 1
    %s23 = scalar_select %p22, 0, %s21
    %s24 = sadd.s32 1, %s15
    %s25 = scalar_select %p22, %s24, %s15
    %p26 = scmp.ge.s32.totalorder %s25, 2
    %s27 = scalar_select %p26, 0, %s25
    %s28 = ssub.s32 %s15, %s27
    %s29 = ssub.s32 %s16, %s23
    %s30 = sor.u32 %s28, %s29
    %p31 = scmp.eq.s32.totalorder %s30, 0
    %s33 = sadd.s32 %s32, 1
    %s34 = scalar_select %p31, %s32, %s33
    %p37 = pneg %p31
    %p38 = scmp.eq.s32.totalorder %s8, 1
    %p39 = por %p37, %p38
    %p40 = scmp.ne.s32.totalorder %s32, %s35
    %p41 = scmp.eq.s32.totalorder %s8, 0
    %p42 = por %p40, %p41
    %p43 = scmp.ne.s32.totalorder %s32, %s35
    %p44 = scmp.eq.s32.totalorder %s13, 1
    %p45 = por %p43, %p44
    %p46 = scmp.ne.s32.totalorder %s35, %s36
    %p47 = scmp.eq.s32.totalorder %s13, 0
    %p48 = por %p46, %p47
    %p49 = scmp.ne.s32.totalorder %s35, %s36
    %p50 = scmp.eq.s32.totalorder %s14, 1
    %p51 = por %p49, %p50
    %p53 = scmp.ne.s32.totalorder %s36, %s52
    %p54 = scmp.eq.s32.totalorder %s14, 0
    %p55 = por %p53, %p54
    %s56 = ssub.s32 %s15, %s27
    %s57 = ssub.s32 %s16, %s23
    %s58 = sor.u32 %s56, %s57
    %p59 = scmp.eq.s32.totalorder %s58, 0
    %s61 = sadd.s32 %s60, 1
    %s62 = scalar_select %p59, %s60, %s61
    %p65 = pneg %p59
    %p66 = scmp.eq.s32.totalorder %s8, 1
    %p67 = por %p65, %p66
    %p68 = scmp.ne.s32.totalorder %s60, %s63
    %p69 = scmp.eq.s32.totalorder %s8, 0
    %p70 = por %p68, %p69
    %p71 = scmp.ne.s32.totalorder %s60, %s63
    %p72 = scmp.eq.s32.totalorder %s13, 1
    %p73 = por %p71, %p72
    %p74 = scmp.ne.s32.totalorder %s63, %s64
    %p75 = scmp.eq.s32.totalorder %s13, 0
    %p76 = por %p74, %p75
    %p77 = scmp.ne.s32.totalorder %s63, %s64
    %p78 = scmp.eq.s32.totalorder %s14, 1
    %p79 = por %p77, %p78
    %p81 = scmp.ne.s32.totalorder %s64, %s80
    %p82 = scmp.eq.s32.totalorder %s14, 0
    %p83 = por %p81, %p82
    %s84 = ssub.s32 %s15, %s27
    %p85 = scmp.eq.s32.totalorder %s84, 0
    %s87 = sadd.s32 %s86, 1
    %s88 = scalar_select %p85, %s86, %s87
    %p91 = pneg %p85
    %p92 = scmp.eq.s32.totalorder %s8, 1
    %p93 = por %p91, %p92
    %p94 = scmp.ne.s32.totalorder %s86, %s89
    %p95 = scmp.eq.s32.totalorder %s8, 0
    %p96 = por %p94, %p95
    %p97 = scmp.ne.s32.totalorder %s86, %s89
    %p98 = scmp.eq.s32.totalorder %s13, 1
    %p99 = por %p97, %p98
    %p100 = scmp.ne.s32.totalorder %s89, %s90
    %p101 = scmp.eq.s32.totalorder %s13, 0
    %p102 = por %p100, %p101
    %p103 = scmp.ne.s32.totalorder %s89, %s90
    %p104 = scmp.eq.s32.totalorder %s14, 1
    %p105 = por %p103, %p104
    %p107 = scmp.ne.s32.totalorder %s90, %s106
    %p108 = scmp.eq.s32.totalorder %s14, 0
    %p109 = por %p107, %p108
    %p110 = scmp.le.s32.totalorder 1, %s8
    %p111 = scmp.lt.s32.totalorder %s8, 3
    %p112 = pnand %p110, %p111
    %p113 = pneg %p112
    // Predicated region
    $region9: #{fn.1} parent=5 // pred_check
      _
    $region10: #{fn.1} parent=5 // pred_check_branch
      %115 = sbr.rel (%p112) target = $region12
    $region11: #{fn.1} parent=5 // pred_region
      %s116 = ssub.s32 %s8, 1
    $region12: #{fn.1} parent=5 // pred_fallthru
      _
    %p117 = scmp.lt.s32.totalorder %s8, 2
    // Predicated region
    $region13: #{fn.1} parent=5 // pred_check
      %p118 = pneg %p117
    $region14: #{fn.1} parent=5 // pred_check_branch
      %120 = sbr.rel (%p118) target = $region16
    $region15: #{fn.1} parent=5 // pred_region
      // Predicated region
      $region17: #{fn.1} parent=15 // pred_check
        %p121 = pneg %p42
      $region18: #{fn.1} parent=15 // pred_check_branch
        %123 = sbr.rel (%p121) target = $region20
      $region19: #{fn.1} parent=15 // pred_region
        %p124 = scmp.lt.s32.totalorder %s15, 1
        %s125 = scalar_select %p124, %s15, 1
        %p126 = scmp.lt.s32.totalorder %s16, 0
        %s127 = scalar_select %p126, %s16, 0
        %s128 = smul.addr %s125, 3
        %s129 = sadd.s32 %s127, %s128
        %s130 = smul.addr %s129, 8
        %s131 = scalar_lea.vmem %s0, %s130
      $region20: #{fn.1} parent=15 // pred_fallthru
        _
      // Predicated region
      $region21: #{fn.1} parent=15 // pred_check
        %p132 = pneg %p70
      $region22: #{fn.1} parent=15 // pred_check_branch
        %134 = sbr.rel (%p132) target = $region24
      $region23: #{fn.1} parent=15 // pred_region
        %p135 = scmp.lt.s32.totalorder %s15, 1
        %s136 = scalar_select %p135, %s15, 1
        %p137 = scmp.lt.s32.totalorder %s16, 0
        %s138 = scalar_select %p137, %s16, 0
        %s139 = sadd.s32 %s138, %s136
        %s140 = scalar_lea.vmem %s1, %s139
      $region24: #{fn.1} parent=15 // pred_fallthru
        _
    $region16: #{fn.1} parent=5 // pred_fallthru
      _
    %p141 = scmp.le.s32.totalorder 1, %s8
    %p142 = scmp.lt.s32.totalorder %s8, 3
    %p143 = pnand %p141, %p142
    %p144 = pneg %p143
    // Predicated region
    $region25: #{fn.1} parent=5 // pred_check
      _
    $region26: #{fn.1} parent=5 // pred_check_branch
      %146 = sbr.rel (%p143) target = $region28
    $region27: #{fn.1} parent=5 // pred_region
      %s147 = ssub.s32 %s8, 1
      %p148 = scmp.lt.s32.totalorder %s17, 1
      %s149 = scalar_select %p148, %s17, 1
      %p150 = scmp.lt.s32.totalorder %s18, 0
      %s151 = scalar_select %p150, %s18, 0
      %s152 = smul.addr %s149, 3
      %s153 = sadd.s32 %s151, %s152
      %s154 = smul.addr %s153, 8
      %s155 = scalar_lea.vmem %s0, %s154
      %p156 = pneg %p48
      %p157 = pneg %p45
      %p158 = scmp.lt.s32.totalorder %s17, 1
      %s159 = scalar_select %p158, %s17, 1
      %p160 = scmp.lt.s32.totalorder %s18, 0
      %s161 = scalar_select %p160, %s18, 0
      %s162 = sadd.s32 %s161, %s159
      %s163 = scalar_lea.vmem %s1, %s162
      %p164 = pneg %p76
      %p165 = pneg %p73
      %p166 = pneg %p102
      %p167 = pneg %p99
      %p168 = scmp.lt.s32.totalorder %s17, 1
      %s169 = scalar_select %p168, %s17, 1
      %s170 = scalar_lea.vmem %s2, %s169
      %p171 = scmp.lt.s32.totalorder %s17, 1
      %s172 = scalar_select %p171, %s17, 1
      %p173 = scmp.lt.s32.totalorder %s18, 0
      %s174 = scalar_select %p173, %s18, 0
      %s175 = smul.addr %s172, 3
      %s176 = sadd.s32 %s174, %s175
      %s177 = smul.addr %s176, 8
      %s178 = scalar_lea.vmem %s0, %s177
      %p179 = scmp.lt.s32.totalorder %s17, 1
      %s180 = scalar_select %p179, %s17, 1
      %p181 = scmp.lt.s32.totalorder %s18, 0
      %s182 = scalar_select %p181, %s18, 0
      %s183 = sadd.s32 %s182, %s180
      %s184 = scalar_lea.vmem %s1, %s183
      %p185 = scmp.lt.s32.totalorder %s17, 1
      %s186 = scalar_select %p185, %s17, 1
      %s187 = scalar_lea.vmem %s2, %s186
      %p188 = scmp.eq.s32.totalorder %s18, 0
      // Predicated region
      $region29: #{fn.1} parent=27 // pred_check
        %p189 = pneg %p188
      $region30: #{fn.1} parent=27 // pred_check_branch
        %191 = sbr.rel (%p189) target = $region32
      $region31: #{fn.1} parent=27 // pred_region
        %vm192 = vcmask 0
        %193 = vst.msk [vmem:[#allocation2] sm:$0x1] %vm192, 0.0
      $region32: #{fn.1} parent=27 // pred_fallthru
        _
      %v194 = vld [vmem:[%s178] sm:$0xff]
      %v195 = vld [vmem:[%s178 + $0x8] sm:$0xff]
      %v196 = vld [vmem:[%s178 + $0x10] sm:$0x1f]
      %v197 = vld [vmem:[%s184] sm:$0x1]
      %vm198 = vcmask 1044480
      %v199 = vsel %vm198, %v196, -inf
      %v200 = vmax.f32 %v194, %v195
      %v201 = vmax.f32 %v200, %v199
      %v202 = vrot.slane %v201, 4
      %v203 = vmax.f32 %v201, %v202
      %v204 = vrot.slane %v203, 2
      %v205 = vmax.f32 %v203, %v204
      %v206 = vrot.slane %v205, 1
      %v207 = vmax.f32 %v205, %v206
      %v208 = vsub.f32 %v194, %v207
      %v209 = vsub.f32 %v195, %v207
      %v210 = vsub.f32 %v196, %v207
      %v211 = vmul.f32 %v208, 1.442695
      %v212 = vpow.pop %v211
      %v213 = vmul.f32 %v209, 1.442695
      %v214 = vpow.pop %v213
      %v215 = vmul.f32 %v210, 1.442695
      %v216 = vpow.pop %v215
      %v217 = vadd.f32 %v212, %v214
      %v218 = vsel %vm198, %v216, 0.0
      %v219 = vadd.f32 %v217, %v218
      %v220 = vrot.slane %v219, 4
      %v221 = vadd.f32 %v219, %v220
      %v222 = vrot.slane %v221, 2
      %v223 = vadd.f32 %v221, %v222
      %v224 = vrot.slane %v223, 1
      %v225 = vadd.f32 %v223, %v224
      %v226 = vlog2.pop %v225
      %v227 = vmul.f32 %v226, 0.6931472
      %v228 = vadd.f32 %v207, %v227
      %v229 = vlaneseq
      %v230 = vshrl.u32 %v229, 7
      %v231 = vadd.s32 %v230, 8
      %v232 = vadd.s32 %v230, 16
      %v233 = vperm.slane %v197, 0
      %vm234 = vcmp.eq.s32.totalorder %v230, %v233
      %vm235 = vcmp.eq.s32.totalorder %v231, %v233
      %vm236 = vcmp.eq.s32.totalorder %v232, %v233
      %v237 = vsel %vm234, %v194, 0.0
      %v238 = vsel %vm235, %v195, 0.0
      %v239 = vsel %vm236, %v196, 0.0
      %v240 = vadd.f32 %v237, %v238
      %v241 = vsel %vm198, %v239, 0.0
      %v242 = vadd.f32 %v240, %v241
      %v243 = vrot.slane %v242, 4
      %v244 = vadd.f32 %v242, %v243
      %v245 = vrot.slane %v244, 2
      %v246 = vadd.f32 %v244, %v245
      %v247 = vrot.slane %v246, 1
      %v248 = vadd.f32 %v246, %v247
      %vm249 = vcmp.ge.s32.totalorder %v197, 0
      %vm250 = vcmp.lt.s32.totalorder %v197, 21
      %vm251 = vmand %vm249, %vm250
      %v252 = vsub.f32 %v228, %v248
      %v253 = vsel %vm251, %v252, 0.0
      %v254 = vld [vmem:[#allocation2] sm:$0x1]
      %vm255 = vcmask 1040384
      %v256 = vsel %vm255, %v253, 0.0
      %257 = vadd.xlane.f32.xlu0 %v256
      %v258 = vpop.xlane.xlu0 %257
      %v259 = vadd.f32 %v254, %v258
      %vm260 = vcmask 0
      %261 = vst.msk [vmem:[#allocation2] sm:$0x1] %vm260, %v259
      // Predicated region
      $region33: #{fn.1} parent=27 // pred_check
        %p262 = pneg %p188
      $region34: #{fn.1} parent=27 // pred_check_branch
        %264 = sbr.rel (%p262) target = $region36
      $region35: #{fn.1} parent=27 // pred_region
        %v265 = vld [vmem:[#allocation2] sm:$0x1]
        %266 = vst.msk [vmem:[%s187] sm:$0x1] %vm260, %v265
      $region36: #{fn.1} parent=27 // pred_fallthru
        _
      %p267 = scmp.lt.s32.totalorder %s17, 1
      %s268 = scalar_select %p267, %s17, 1
      %s269 = scalar_lea.vmem %s2, %s268
      // Predicated region
      $region37: #{fn.1} parent=27 // pred_check
        %p270 = pneg %p99
      $region38: #{fn.1} parent=27 // pred_check_branch
        %272 = sbr.rel (%p270) target = $region40
      $region39: #{fn.1} parent=27 // pred_region
        _
      $region40: #{fn.1} parent=27 // pred_fallthru
        _
    $region28: #{fn.1} parent=5 // pred_fallthru
      _
    %p273 = scmp.le.s32.totalorder 2, %s8
    // Predicated region
    $region41: #{fn.1} parent=5 // pred_check
      %p274 = pneg %p273
    $region42: #{fn.1} parent=5 // pred_check_branch
      %276 = sbr.rel (%p274) target = $region44
    $region43: #{fn.1} parent=5 // pred_region
      %s277 = ssub.s32 %s8, 2
      // Predicated region
      $region45: #{fn.1} parent=43 // pred_check
        %p278 = pneg %p105
      $region46: #{fn.1} parent=43 // pred_check_branch
        %280 = sbr.rel (%p278) target = $region48
      $region47: #{fn.1} parent=43 // pred_region
        %p281 = scmp.lt.s32.totalorder %s19, 1
        %s282 = scalar_select %p281, %s19, 1
        %s283 = scalar_lea.vmem %s2, %s282
      $region48: #{fn.1} parent=43 // pred_fallthru
        _
    $region44: #{fn.1} parent=5 // pred_fallthru
      _
  $region6: #{fn.1} parent=0 // loop_footer
    %s12 = sadd.s32 1, %s8
  $region7: #{fn.1} parent=0 // loop_footer_branch
    %7 = sbr.rel target = $region3
  $region8: #{fn.1} parent=0 // loop_exit
    _

</llo_original>
